<compile_context>
chip_gen: v5e
topology: v5e:2x2
jax: 0.10.0
libtpu: 0.0.40
codegen_flags: <defaults>
</compile_context>

<pallas_src>
import jax
import jax.numpy as jnp
from jax.experimental import pallas as pl
from jax.experimental.pallas import tpu as pltpu


def _round_up(n, m):
    return ((n + m - 1) // m) * m


def _vmem_limit(resident_bytes, streamed_bytes):
    """Resident blocks x1, streamed (pipelined) blocks x2, plus headroom."""
    want = resident_bytes + 2 * streamed_bytes + (4 << 20)
    return int(min(48 << 20, max(16 << 20, want)))


# --------------------------------------------------------------------------
# Phase 1: U = LayerNorm(x) @ W_xh + b_hh   (parallel over (T*B) row blocks)
# --------------------------------------------------------------------------
def _make_in_proj_kernel(in_dim):
    eps = 1e-5
    inv_in = 1.0 / float(in_dim)

    def kernel(x_ref, lnw_ref, lnb_ref, wxh_ref, bhh_ref, u_ref):
        x = x_ref[...].astype(jnp.float32)                        # (tm, in_p)
        # Padded lanes are zero, so sums over the full padded width are exact
        # sums over the true in_dim; variance via E[x^2] - mu^2 (no masks).
        mu = jnp.sum(x, axis=-1, keepdims=True) * inv_in
        var = jnp.sum(x * x, axis=-1, keepdims=True) * inv_in - mu * mu
        var = jnp.maximum(var, 0.0)
        xn = (x - mu) * jax.lax.rsqrt(var + eps) * lnw_ref[...] + lnb_ref[...]
        u = jnp.dot(xn.astype(wxh_ref.dtype), wxh_ref[...],
                    preferred_element_type=jnp.float32)
        u_ref[...] = u + bhh_ref[...]

    return kernel


# --------------------------------------------------------------------------
# Phase 2: serial recurrence, T_blk timesteps per grid step, weights resident
# --------------------------------------------------------------------------
def _make_recurrent_kernel(hidden_dim, t_blk):
    eps = 1e-5
    inv_h = 1.0 / float(hidden_dim)
    inv_sqrt2 = 0.7071067811865476

    def kernel(u_ref, h0_ref, lnhw_ref, lnhb_ref, whh_ref, hseq_ref, carry_ref):
        # The VMEM scratch carry persists across grid steps.
        @pl.when(pl.program_id(0) == 0)
        def _():
            carry_ref[...] = h0_ref[...]

        lnw = lnhw_ref[...]
        lnb = lnhb_ref[...]

        def step(t, dummy):
            h = carry_ref[...]                                    # (B_p, h_p) f32
            mu = jnp.sum(h, axis=-1, keepdims=True) * inv_h
            var = jnp.sum(h * h, axis=-1, keepdims=True) * inv_h - mu * mu
            var = jnp.maximum(var, 0.0)
            hn = (h - mu) * jax.lax.rsqrt(var + eps) * lnw + lnb
            # f32 MXU matmul: the MXU is nearly idle at M=B_p, and keeping the
            # recurrent weight path in f32 limits per-step error compounding.
            g = jnp.dot(hn, whh_ref[...],
                        preferred_element_type=jnp.float32) + u_ref[t]
            # Exact (erf) GELU = torch.nn.functional.gelu default.
            h_new = 0.5 * g * (1.0 + jax.lax.erf(g * inv_sqrt2))
            carry_ref[...] = h_new
            hseq_ref[t] = h_new
            return dummy

        jax.lax.fori_loop(0, t_blk, step, 0, unroll=True)

    return kernel


# --------------------------------------------------------------------------
# Phase 3: Y = H @ W_hy + b_hy   (parallel over (T*B) row blocks)
# --------------------------------------------------------------------------
def _out_proj_kernel(h_ref, why_ref, bhy_ref, y_ref):
    h = h_ref[...].astype(why_ref.dtype)
    y = jnp.dot(h, why_ref[...], preferred_element_type=jnp.float32)
    y_ref[...] = (y + bhy_ref[...]).astype(y_ref.dtype)


# --------------------------------------------------------------------------
# Wrapper
# --------------------------------------------------------------------------
def vanilla_rnn_forward_seq(x_seq, h0, params):
    """Runs T RNN time slices (3 pallas_calls: proj / recurrence / proj).

    x_seq: (T, B, in_dim) f32;  h0: (B, hidden_dim) f32.
    Returns (y_seq, h_T): (T, B, out_dim), (B, hidden_dim).
    """
    T, B, in_dim = x_seq.shape
    hidden_dim = params["W_hh"].shape[0]
    out_dim = params["W_hy"].shape[1]

    # Padded, lane-dense shapes. B padded to 16 for clean bf16 sublane packing.
    B_p = _round_up(B, 16)
    in_p = _round_up(in_dim, 128)
    h_p = _round_up(hidden_dim, 128)
    out_p = _round_up(out_dim, 128)
    T_blk = min(T, 8)                      # timesteps per serial grid step
    T_p = _round_up(T, T_blk)
    M = T_p * B_p                          # rows for the batched projections
    tm = T_blk * B_p                       # projection row-block (M % tm == 0)

    def pad2(a, r, c):
        return jnp.pad(a, ((0, r - a.shape[0]), (0, c - a.shape[1])))

    # Zero padding keeps padded lanes inert through LN, matmuls and gelu(0)=0.
    w_xh = pad2(params["W_xh"], in_p, h_p).astype(jnp.bfloat16)
    w_hh = pad2(params["W_hh"], h_p, h_p)                       # f32 (recurrent)
    w_hy = pad2(params["W_hy"], h_p, out_p).astype(jnp.bfloat16)
    b_hh = pad2(params["b_hh"], 1, h_p)
    b_hy = pad2(params["b_hy"], 1, out_p)
    ln_w = pad2(params["ln_w"], 1, in_p)
    ln_b = pad2(params["ln_b"], 1, in_p)
    ln_h_w = pad2(params["ln_h_w"], 1, h_p)
    ln_h_b = pad2(params["ln_h_b"], 1, h_p)
    h0_p = pad2(h0, B_p, h_p)

    x_p = jnp.pad(x_seq, ((0, T_p - T), (0, B_p - B), (0, in_p - in_dim)))
    x_flat = x_p.reshape(M, in_p)

    def resident(shape):
        return pl.BlockSpec(shape, lambda i: (0,) * len(shape))

    # ---- Phase 1: U = LN(x) @ W_xh + b_hh ---------------------------------
    p1_resident = w_xh.size * 2 + (ln_w.size + ln_b.size + b_hh.size) * 4
    p1_streamed = tm * (in_p + h_p) * 4
    u_flat = pl.pallas_call(
        _make_in_proj_kernel(in_dim),
        out_shape=jax.ShapeDtypeStruct((M, h_p), jnp.float32),
        grid_spec=pltpu.PrefetchScalarGridSpec(
            num_scalar_prefetch=0,
            grid=(M // tm,),
            in_specs=[
                pl.BlockSpec((tm, in_p), lambda i: (i, 0)),      # x rows (streamed)
                resident((1, in_p)), resident((1, in_p)),        # ln_w, ln_b
                resident((in_p, h_p)),                           # W_xh (bf16)
                resident((1, h_p)),                              # b_hh
            ],
            out_specs=pl.BlockSpec((tm, h_p), lambda i: (i, 0)),
        ),
        compiler_params=pltpu.CompilerParams(
            dimension_semantics=("parallel",),
            vmem_limit_bytes=_vmem_limit(p1_resident, p1_streamed),
        ),
        cost_estimate=pl.CostEstimate(
            flops=int(2 * M * in_p * h_p),
            transcendentals=int(M),
            bytes_accessed=int(M * (in_p + h_p) * 4 + in_p * h_p * 2),
        ),
    )(x_flat, ln_w, ln_b, w_xh, b_hh)
    u = u_flat.reshape(T_p, B_p, h_p)

    # ---- Phase 2: serial recurrence ---------------------------------------
    p2_resident = (w_hh.size + h0_p.size + ln_h_w.size + ln_h_b.size
                   + B_p * h_p) * 4
    p2_streamed = 2 * T_blk * B_p * h_p * 4
    h_seq = pl.pallas_call(
        _make_recurrent_kernel(hidden_dim, T_blk),
        out_shape=jax.ShapeDtypeStruct((T_p, B_p, h_p), jnp.float32),
        grid_spec=pltpu.PrefetchScalarGridSpec(
            num_scalar_prefetch=0,
            grid=(T_p // T_blk,),
            in_specs=[
                pl.BlockSpec((T_blk, B_p, h_p), lambda i: (i, 0, 0)),  # U (streamed)
                resident((B_p, h_p)),                                  # h0
                resident((1, h_p)), resident((1, h_p)),                # ln_h_w, ln_h_b
                resident((h_p, h_p)),                                  # W_hh (f32)
            ],
            out_specs=pl.BlockSpec((T_blk, B_p, h_p), lambda i: (i, 0, 0)),
            scratch_shapes=[pltpu.VMEM((B_p, h_p), jnp.float32)],      # h carry
        ),
        compiler_params=pltpu.CompilerParams(
            dimension_semantics=("arbitrary",),       # recurrence is sequential
            vmem_limit_bytes=_vmem_limit(p2_resident, p2_streamed),
        ),
        cost_estimate=pl.CostEstimate(
            flops=int(2 * T_p * B_p * h_p * h_p),
            transcendentals=int(T_p * B_p * (h_p + 1)),
            bytes_accessed=int(2 * T_p * B_p * h_p * 4 + h_p * h_p * 4),
        ),
    )(u, h0_p, ln_h_w, ln_h_b, w_hh)

    # ---- Phase 3: Y = H @ W_hy + b_hy --------------------------------------
    h_flat = h_seq.reshape(M, h_p)
    p3_resident = w_hy.size * 2 + b_hy.size * 4
    p3_streamed = tm * (h_p + out_p) * 4
    y_flat = pl.pallas_call(
        _out_proj_kernel,
        out_shape=jax.ShapeDtypeStruct((M, out_p), jnp.float32),
        grid_spec=pltpu.PrefetchScalarGridSpec(
            num_scalar_prefetch=0,
            grid=(M // tm,),
            in_specs=[
                pl.BlockSpec((tm, h_p), lambda i: (i, 0)),       # H rows (streamed)
                resident((h_p, out_p)),                          # W_hy (bf16)
                resident((1, out_p)),                            # b_hy
            ],
            out_specs=pl.BlockSpec((tm, out_p), lambda i: (i, 0)),
        ),
        compiler_params=pltpu.CompilerParams(
            dimension_semantics=("parallel",),
            vmem_limit_bytes=_vmem_limit(p3_resident, p3_streamed),
        ),
        cost_estimate=pl.CostEstimate(
            flops=int(2 * M * h_p * out_p),
            transcendentals=0,
            bytes_accessed=int(M * (h_p + out_p) * 4 + h_p * out_p * 2),
        ),
    )(h_flat, w_hy, b_hy)
    y = y_flat.reshape(T_p, B_p, out_p)

    y_seq = y[:T, :B, :out_dim]
    h_T = h_seq[T - 1, :B, :hidden_dim]
    return y_seq, h_T


def vanilla_rnn_forward(x, h_prev, params):
    """Single time slice, matching VanillaRNN.forward(x, h_prev) -> (y, h)."""
    y_seq, h = vanilla_rnn_forward_seq(x[None], h_prev, params)
    return y_seq[0], h


def init_params(key, in_dim, hidden_dim, out_dim):
    """Synthetic params; weights stored (in_features, out_features) == torch W.T."""
    k = jax.random.split(key, 5)
    W_xh = jax.random.normal(k[0], (in_dim, hidden_dim), jnp.float32) * 0.1
    W_hh = jax.random.normal(k[1], (hidden_dim, hidden_dim), jnp.float32) * 0.1
    W_hy = jax.random.normal(k[2], (hidden_dim, out_dim), jnp.float32) * 0.1
    b_hh = jax.random.normal(k[3], (1, hidden_dim), jnp.float32) * 0.05
    b_hy = jax.random.normal(k[4], (1, out_dim), jnp.float32) * 0.05
    ln_w = jnp.ones((1, in_dim), jnp.float32)
    ln_b = jnp.zeros((1, in_dim), jnp.float32)
    ln_h_w = jnp.ones((1, hidden_dim), jnp.float32)
    ln_h_b = jnp.zeros((1, hidden_dim), jnp.float32)
    return dict(W_xh=W_xh, W_hh=W_hh, W_hy=W_hy, b_hh=b_hh, b_hy=b_hy,
                ln_w=ln_w, ln_b=ln_b, ln_h_w=ln_h_w, ln_h_b=ln_h_b)


def _reference(x, h_prev, p):
    """Pure-JAX single-step reference (f32 everywhere)."""
    eps = 1e-5
    mu = x.mean(-1, keepdims=True)
    var = ((x - mu) ** 2).mean(-1, keepdims=True)
    xn = (x - mu) / jnp.sqrt(var + eps) * p["ln_w"] + p["ln_b"]
    mu_h = h_prev.mean(-1, keepdims=True)
    var_h = ((h_prev - mu_h) ** 2).mean(-1, keepdims=True)
    hn = (h_prev - mu_h) / jnp.sqrt(var_h + eps) * p["ln_h_w"] + p["ln_h_b"]
    g = xn @ p["W_xh"] + hn @ p["W_hh"] + p["b_hh"]
    h = jax.nn.gelu(g, approximate=False)
    y = h @ p["W_hy"] + p["b_hy"]
    return y, h


def _reference_seq(x_seq, h0, p):
    def step(h, x):
        y, h_new = _reference(x, h, p)
        return h_new, y
    h_T, ys = jax.lax.scan(step, h0, x_seq)
    return ys, h_T


if __name__ == "__main__":
    batch = 8
    in_dim = 16
    hidden_dim = 32
    out_dim = 8
    T = 12

    key = jax.random.PRNGKey(0)
    kx, kh, kp = jax.random.split(key, 3)
    x_seq = jax.random.normal(kx, (T, batch, in_dim), jnp.float32)
    h0 = jax.random.normal(kh, (batch, hidden_dim), jnp.float32)
    params = init_params(kp, in_dim, hidden_dim, out_dim)

    # Multi-step path (3 pallas_calls: input proj / recurrence / output proj).
    y_seq, h_T = vanilla_rnn_forward_seq(x_seq, h0, params)
    jax.block_until_ready((y_seq, h_T))

    y_ref, h_ref_T = _reference_seq(x_seq, h0, params)
    assert y_seq.shape == (T, batch, out_dim) and h_T.shape == (batch, hidden_dim)
    # bf16 projection weights + f32 recurrence -> loose-ish tolerance over T=12.
    assert jnp.allclose(y_seq, y_ref, atol=5e-2, rtol=5e-2)
    assert jnp.allclose(h_T, h_ref_T, atol=5e-2, rtol=5e-2)

    # Single-slice API matching the PyTorch module's forward().
    y1, h1 = vanilla_rnn_forward(x_seq[0], h0, params)
    jax.block_until_ready((y1, h1))
    y1_ref, h1_ref = _reference(x_seq[0], h0, params)
    assert y1.shape == (batch, out_dim) and h1.shape == (batch, hidden_dim)
    assert jnp.allclose(y1, y1_ref, atol=2e-2, rtol=2e-2)
    assert jnp.allclose(h1, h1_ref, atol=2e-2, rtol=2e-2)

    print("KERNEL_OK")
</pallas_src>

<mosaic_0001>
module attributes {stable_mosaic.version = 11 : i64} {
  func.func @kernel(%arg0: i32, %arg1: memref<128x128xf32, #tpu.memory_space<vmem>>, %arg2: memref<1x128xf32, #tpu.memory_space<vmem>>, %arg3: memref<1x128xf32, #tpu.memory_space<vmem>>, %arg4: memref<128x128xbf16, #tpu.memory_space<vmem>>, %arg5: memref<1x128xf32, #tpu.memory_space<vmem>>, %arg6: memref<128x128xf32, #tpu.memory_space<vmem>>) attributes {dimension_semantics = [#tpu.dimension_semantics<parallel>], iteration_bounds = array<i64: 2>, scalar_prefetch = 0 : i64, scratch_operands = 0 : i64, tpu.core_type = #tpu.core_type<tc>, window_params = [{transform_indices = @transform_0, window_bounds = array<i64: 128, 128>}, {pipeline_mode = #tpu.pipeline_mode<synchronous>, transform_indices = @transform_1, window_bounds = array<i64: 1, 128>}, {pipeline_mode = #tpu.pipeline_mode<synchronous>, transform_indices = @transform_2, window_bounds = array<i64: 1, 128>}, {pipeline_mode = #tpu.pipeline_mode<synchronous>, transform_indices = @transform_3, window_bounds = array<i64: 128, 128>}, {pipeline_mode = #tpu.pipeline_mode<synchronous>, transform_indices = @transform_4, window_bounds = array<i64: 1, 128>}, {transform_indices = @transform_5, window_bounds = array<i64: 128, 128>}]} {
    %c0 = arith.constant 0 : index
    %c0_0 = arith.constant 0 : index
    %0 = vector.load %arg1[%c0, %c0_0] : memref<128x128xf32, #tpu.memory_space<vmem>>, vector<128x128xf32>
    %cst = arith.constant dense<0.000000e+00> : vector<128xf32>
    %1 = vector.multi_reduction <add>, %0, %cst [1] : vector<128x128xf32> to vector<128xf32>
    %2 = vector.shape_cast %1 : vector<128xf32> to vector<128x1xf32>
    %cst_1 = arith.constant 6.250000e-02 : f32
    %3 = vector.broadcast %cst_1 : f32 to vector<128x1xf32>
    %4 = arith.mulf %2, %3 : vector<128x1xf32>
    %5 = arith.mulf %0, %0 : vector<128x128xf32>
    %cst_2 = arith.constant dense<0.000000e+00> : vector<128xf32>
    %6 = vector.multi_reduction <add>, %5, %cst_2 [1] : vector<128x128xf32> to vector<128xf32>
    %7 = vector.shape_cast %6 : vector<128xf32> to vector<128x1xf32>
    %cst_3 = arith.constant 6.250000e-02 : f32
    %8 = vector.broadcast %cst_3 : f32 to vector<128x1xf32>
    %9 = arith.mulf %7, %8 : vector<128x1xf32>
    %10 = arith.mulf %4, %4 : vector<128x1xf32>
    %11 = arith.subf %9, %10 : vector<128x1xf32>
    %cst_4 = arith.constant 0.000000e+00 : f32
    %12 = vector.broadcast %cst_4 : f32 to vector<128x1xf32>
    %13 = arith.maximumf %11, %12 : vector<128x1xf32>
    %14 = vector.broadcast %4 : vector<128x1xf32> to vector<128x128xf32>
    %15 = arith.subf %0, %14 : vector<128x128xf32>
    %cst_5 = arith.constant 9.99999974E-6 : f32
    %16 = vector.broadcast %cst_5 : f32 to vector<128x1xf32>
    %17 = arith.addf %13, %16 : vector<128x1xf32>
    %18 = math.rsqrt %17 : vector<128x1xf32>
    %19 = vector.broadcast %18 : vector<128x1xf32> to vector<128x128xf32>
    %20 = arith.mulf %15, %19 : vector<128x128xf32>
    %c0_6 = arith.constant 0 : index
    %c0_7 = arith.constant 0 : index
    %21 = vector.load %arg2[%c0_6, %c0_7] : memref<1x128xf32, #tpu.memory_space<vmem>>, vector<1x128xf32>
    %22 = vector.broadcast %21 : vector<1x128xf32> to vector<128x128xf32>
    %23 = arith.mulf %20, %22 : vector<128x128xf32>
    %c0_8 = arith.constant 0 : index
    %c0_9 = arith.constant 0 : index
    %24 = vector.load %arg3[%c0_8, %c0_9] : memref<1x128xf32, #tpu.memory_space<vmem>>, vector<1x128xf32>
    %25 = vector.broadcast %24 : vector<1x128xf32> to vector<128x128xf32>
    %26 = arith.addf %23, %25 : vector<128x128xf32>
    %27 = arith.truncf %26 : vector<128x128xf32> to vector<128x128xbf16>
    %c0_10 = arith.constant 0 : index
    %c0_11 = arith.constant 0 : index
    %28 = vector.load %arg4[%c0_10, %c0_11] : memref<128x128xbf16, #tpu.memory_space<vmem>>, vector<128x128xbf16>
    %cst_12 = arith.constant dense<0.000000e+00> : vector<128x128xf32>
    %29 = tpu.matmul %27, %28, %cst_12 {dimension_numbers = #tpu.dot_dimension_numbers<[1], [0], [0], [1], [0, 0, 1, 1], [], []>} : vector<128x128xbf16>, vector<128x128xbf16>, vector<128x128xf32> -> vector<128x128xf32>
    %c0_13 = arith.constant 0 : index
    %c0_14 = arith.constant 0 : index
    %30 = vector.load %arg5[%c0_13, %c0_14] : memref<1x128xf32, #tpu.memory_space<vmem>>, vector<1x128xf32>
    %31 = vector.broadcast %30 : vector<1x128xf32> to vector<128x128xf32>
    %32 = arith.addf %29, %31 : vector<128x128xf32>
    %c0_15 = arith.constant 0 : index
    %c0_16 = arith.constant 0 : index
    %33 = vector.load %arg6[%c0_15, %c0_16] : memref<128x128xf32, #tpu.memory_space<vmem>>, vector<128x128xf32>
    tpu.vector_store %arg6[%c0_15, %c0_16], %32 {strides = array<i32>} : memref<128x128xf32, #tpu.memory_space<vmem>>, vector<128x128xf32>,
    return
  }
  func.func @transform_0(%arg0: i32) -> (i32, i32) {
    %c0_i32 = arith.constant 0 : i32
    %c0_i32_0 = arith.constant 0 : i32
    return %arg0, %c0_i32 : i32, i32
  }
  func.func @transform_1(%arg0: i32) -> (i32, i32) {
    %c0_i32 = arith.constant 0 : i32
    %c0_i32_0 = arith.constant 0 : i32
    %c0_i32_1 = arith.constant 0 : i32
    return %c0_i32, %c0_i32_0 : i32, i32
  }
  func.func @transform_2(%arg0: i32) -> (i32, i32) {
    %c0_i32 = arith.constant 0 : i32
    %c0_i32_0 = arith.constant 0 : i32
    %c0_i32_1 = arith.constant 0 : i32
    return %c0_i32, %c0_i32_0 : i32, i32
  }
  func.func @transform_3(%arg0: i32) -> (i32, i32) {
    %c0_i32 = arith.constant 0 : i32
    %c0_i32_0 = arith.constant 0 : i32
    %c0_i32_1 = arith.constant 0 : i32
    return %c0_i32, %c0_i32_0 : i32, i32
  }
  func.func @transform_4(%arg0: i32) -> (i32, i32) {
    %c0_i32 = arith.constant 0 : i32
    %c0_i32_0 = arith.constant 0 : i32
    %c0_i32_1 = arith.constant 0 : i32
    return %c0_i32, %c0_i32_0 : i32, i32
  }
  func.func @transform_5(%arg0: i32) -> (i32, i32) {
    %c0_i32 = arith.constant 0 : i32
    %c0_i32_0 = arith.constant 0 : i32
    return %arg0, %c0_i32 : i32, i32
  }
}

</mosaic_0001>

<llo_original>
// kernel: tpu_custom_call.1
$region0: #{tpu_custom_call.1}
  #allocation0 [shape = 'u32[]', space=smem, size = 0x4, offset = 0x4, fixed_abs, tag = 'smem constant byte address 0x4 - core index']
  #allocation1 [shape = 'u32[72,128]{1,0:T(1,128)}', space=vmem, size = 0x9000, scoped, tag = 'internal scratch']
  %s0 = inlined_call_operand.hbm [shape: f32[256,128], index: 0, kind: input, shape index: {}]
  %s1 = inlined_call_operand.hbm [shape: f32[1,128], index: 1, kind: input, shape index: {}]
  %s2 = inlined_call_operand.vmem [shape: f32[1,128], index: 2, kind: input, shape index: {}]
  %s3 = inlined_call_operand.hbm [shape: bf16[128,128], index: 3, kind: input, shape index: {}]
  %s4 = inlined_call_operand.vmem [shape: f32[1,128], index: 4, kind: input, shape index: {}]
  %s5 = inlined_call_operand.hbm [shape: f32[256,128], index: 5, kind: output, shape index: {}]
  %s6 = sld [smem:[#allocation0]]
  $region65: #{tpu_custom_call.1} parent=0
    _
  %s8 = ssub.s32 1, %s6
  %s9 = scalar_select 0, %s8, %s6
  $region1: #{tpu_custom_call.1} parent=0
    #allocation2 [shape = 'u8[131072]{0}', space=vmem, size = 0x20000, scoped, tag = 'input window, operand 0']
    #allocation3 [shape = 's32[2]{0}', space=sflag, size = 0x8, scoped, tag = 'scoped memory for tpu_custom_call.1']
    #allocation4 [shape = 's32[2]{0}', space=sflag, size = 0x8, scoped, tag = 'scoped memory for tpu_custom_call.1']
    #allocation5 [shape = 'u8[512]{0}', space=vmem, size = 0x400, scoped, tag = 'input window, operand 1, single buffered']
    #allocation6 [shape = 's32[1]{0}', space=sflag, size = 0x4, scoped, tag = 'scoped memory for tpu_custom_call.1']
    #allocation7 [shape = 'u8[32768]{0}', space=vmem, size = 0x8000, scoped, tag = 'input window, operand 3, single buffered']
    #allocation8 [shape = 'u8[131072]{0}', space=vmem, size = 0x20000, scoped, tag = 'output window, operand 0']
    %10 = vsyncpa [#allocation3], 0
    %s11 = scalar_lea.sflag [#allocation3], 1
    %12 = vsyncpa %s11, 0
    %13 = vsyncpa [#allocation6], 0
    %14 = vsyncpa [#allocation4], 0
    %s15 = scalar_lea.sflag [#allocation4], 1
    %16 = vsyncpa %s15, 0
    loop: start=0, step=1, limit=4
    $region2: #{tpu_custom_call.1} parent=1 // loop_pre_header
      _
    $region3: #{tpu_custom_call.1} parent=1 // loop_header
      %s18 = sphi 0, %s22
      %p19 = scmp.ge.s32.totalorder %s18, 4
      %s28 = sphi 0, %s30
      %s31 = sphi 0, %s28
      %s32 = sphi 0, %s31
      %s48 = sphi 0, %s32
      %s52 = sphi 0, %s52
      %s54 = sphi 0, %s52
      %s55 = sphi 0, %s54
      %s69 = sphi 0, %s55
      %s73 = sphi 0, %s73
      %s75 = sphi 0, %s73
      %s76 = sphi 0, %s75
      %s90 = sphi 0, %s76
      %s94 = sphi 0, %s94
      %s96 = sphi 0, %s94
      %s97 = sphi 0, %s96
      %s111 = sphi 0, %s97
      %s115 = sphi 0, %s115
      %s117 = sphi 0, %s115
      %s118 = sphi 0, %s117
      %s132 = sphi 0, %s118
      %s138 = sphi 0, %s140
      %s141 = sphi 0, %s138
      %s142 = sphi 0, %s141
      %s158 = sphi 0, %s142
    $region4: #{tpu_custom_call.1} parent=1 // loop_header_branch
      %21 = sbr.rel (%p19) target = $region8
    $region5: #{tpu_custom_call.1} parent=1 // loop_body
      %s23 = ssub.s32 %s18, 1
      %s24 = ssub.s32 %s18, 2
      %s25 = sadd.s32 %s18, 1
      %s26 = ssub.s32 %s18, %s25
      %p27 = scmp.eq.s32.totalorder %s26, 0
      %s29 = sadd.s32 %s28, 1
      %s30 = scalar_select %p27, %s28, %s29
      %p33 = pneg %p27
      %p34 = scmp.eq.s32.totalorder %s18, 1
      %p35 = por %p33, %p34
      %p36 = scmp.ne.s32.totalorder %s28, %s31
      %p37 = scmp.eq.s32.totalorder %s18, 0
      %p38 = por %p36, %p37
      %p39 = scmp.ne.s32.totalorder %s28, %s31
      %p40 = scmp.eq.s32.totalorder %s23, 1
      %p41 = por %p39, %p40
      %p42 = scmp.ne.s32.totalorder %s31, %s32
      %p43 = scmp.eq.s32.totalorder %s23, 0
      %p44 = por %p42, %p43
      %p45 = scmp.ne.s32.totalorder %s31, %s32
      %p46 = scmp.eq.s32.totalorder %s24, 1
      %p47 = por %p45, %p46
      %p49 = scmp.ne.s32.totalorder %s32, %s48
      %p50 = scmp.eq.s32.totalorder %s24, 0
      %p51 = por %p49, %p50
      %s53 = sadd.s32 %s52, 1
      %p56 = scmp.eq.s32.totalorder %s18, 1
      %p57 = scmp.ne.s32.totalorder %s52, %s54
      %p58 = scmp.eq.s32.totalorder %s18, 0
      %p59 = por %p57, %p58
      %p60 = scmp.ne.s32.totalorder %s52, %s54
      %p61 = scmp.eq.s32.totalorder %s23, 1
      %p62 = por %p60, %p61
      %p63 = scmp.ne.s32.totalorder %s54, %s55
      %p64 = scmp.eq.s32.totalorder %s23, 0
      %p65 = por %p63, %p64
      %p66 = scmp.ne.s32.totalorder %s54, %s55
      %p67 = scmp.eq.s32.totalorder %s24, 1
      %p68 = por %p66, %p67
      %p70 = scmp.ne.s32.totalorder %s55, %s69
      %p71 = scmp.eq.s32.totalorder %s24, 0
      %p72 = por %p70, %p71
      %s74 = sadd.s32 %s73, 1
      %p77 = scmp.eq.s32.totalorder %s18, 1
      %p78 = scmp.ne.s32.totalorder %s73, %s75
      %p79 = scmp.eq.s32.totalorder %s18, 0
      %p80 = por %p78, %p79
      %p81 = scmp.ne.s32.totalorder %s73, %s75
      %p82 = scmp.eq.s32.totalorder %s23, 1
      %p83 = por %p81, %p82
      %p84 = scmp.ne.s32.totalorder %s75, %s76
      %p85 = scmp.eq.s32.totalorder %s23, 0
      %p86 = por %p84, %p85
      %p87 = scmp.ne.s32.totalorder %s75, %s76
      %p88 = scmp.eq.s32.totalorder %s24, 1
      %p89 = por %p87, %p88
      %p91 = scmp.ne.s32.totalorder %s76, %s90
      %p92 = scmp.eq.s32.totalorder %s24, 0
      %p93 = por %p91, %p92
      %s95 = sadd.s32 %s94, 1
      %p98 = scmp.eq.s32.totalorder %s18, 1
      %p99 = scmp.ne.s32.totalorder %s94, %s96
      %p100 = scmp.eq.s32.totalorder %s18, 0
      %p101 = por %p99, %p100
      %p102 = scmp.ne.s32.totalorder %s94, %s96
      %p103 = scmp.eq.s32.totalorder %s23, 1
      %p104 = por %p102, %p103
      %p105 = scmp.ne.s32.totalorder %s96, %s97
      %p106 = scmp.eq.s32.totalorder %s23, 0
      %p107 = por %p105, %p106
      %p108 = scmp.ne.s32.totalorder %s96, %s97
      %p109 = scmp.eq.s32.totalorder %s24, 1
      %p110 = por %p108, %p109
      %p112 = scmp.ne.s32.totalorder %s97, %s111
      %p113 = scmp.eq.s32.totalorder %s24, 0
      %p114 = por %p112, %p113
      %s116 = sadd.s32 %s115, 1
      %p119 = scmp.eq.s32.totalorder %s18, 1
      %p120 = scmp.ne.s32.totalorder %s115, %s117
      %p121 = scmp.eq.s32.totalorder %s18, 0
      %p122 = por %p120, %p121
      %p123 = scmp.ne.s32.totalorder %s115, %s117
      %p124 = scmp.eq.s32.totalorder %s23, 1
      %p125 = por %p123, %p124
      %p126 = scmp.ne.s32.totalorder %s117, %s118
      %p127 = scmp.eq.s32.totalorder %s23, 0
      %p128 = por %p126, %p127
      %p129 = scmp.ne.s32.totalorder %s117, %s118
      %p130 = scmp.eq.s32.totalorder %s24, 1
      %p131 = por %p129, %p130
      %p133 = scmp.ne.s32.totalorder %s118, %s132
      %p134 = scmp.eq.s32.totalorder %s24, 0
      %p135 = por %p133, %p134
      %s136 = ssub.s32 %s18, %s25
      %p137 = scmp.eq.s32.totalorder %s136, 0
      %s139 = sadd.s32 %s138, 1
      %s140 = scalar_select %p137, %s138, %s139
      %p143 = pneg %p137
      %p144 = scmp.eq.s32.totalorder %s18, 1
      %p145 = por %p143, %p144
      %p146 = scmp.ne.s32.totalorder %s138, %s141
      %p147 = scmp.eq.s32.totalorder %s18, 0
      %p148 = por %p146, %p147
      %p149 = scmp.ne.s32.totalorder %s138, %s141
      %p150 = scmp.eq.s32.totalorder %s23, 1
      %p151 = por %p149, %p150
      %p152 = scmp.ne.s32.totalorder %s141, %s142
      %p153 = scmp.eq.s32.totalorder %s23, 0
      %p154 = por %p152, %p153
      %p155 = scmp.ne.s32.totalorder %s141, %s142
      %p156 = scmp.eq.s32.totalorder %s24, 1
      %p157 = por %p155, %p156
      %p159 = scmp.ne.s32.totalorder %s142, %s158
      %p160 = scmp.eq.s32.totalorder %s24, 0
      %p161 = por %p159, %p160
      %p162 = scmp.le.s32.totalorder 1, %s18
      %p163 = scmp.lt.s32.totalorder %s18, 3
      %p164 = pnand %p162, %p163
      %p165 = pneg %p164
      // Predicated region
      $region9: #{tpu_custom_call.1} parent=5 // pred_check
        _
      $region10: #{tpu_custom_call.1} parent=5 // pred_check_branch
        %167 = sbr.rel (%p164) target = $region12
      $region11: #{tpu_custom_call.1} parent=5 // pred_region
        %s168 = ssub.s32 %s18, 1
        // Predicated region
        $region13: #{tpu_custom_call.1} parent=11 // pred_check
          %p169 = pneg %p65
        $region14: #{tpu_custom_call.1} parent=11 // pred_check_branch
          %171 = sbr.rel (%p169) target = $region16
        $region15: #{tpu_custom_call.1} parent=11 // pred_region
          %173 = vsyncadd [#allocation6], 0
          %s175 = sshll.u32 %s1, 4
          %s176 = int_to_ptr.hbm [resolvable:$true] %s175
          %s177 = sshll.u32 [#allocation5], 4
          %s178 = int_to_ptr.vmem [resolvable:$true] %s177
          %180 = dma.hbm_to_vmem [thread:$0]  %s176, 16, %s178, [#allocation6]
        $region16: #{tpu_custom_call.1} parent=11 // pred_fallthru
          _
        // Predicated region
        $region17: #{tpu_custom_call.1} parent=11 // pred_check
          %p181 = pneg %p86
        $region18: #{tpu_custom_call.1} parent=11 // pred_check_branch
          %183 = sbr.rel (%p181) target = $region20
        $region19: #{tpu_custom_call.1} parent=11 // pred_region
          _
        $region20: #{tpu_custom_call.1} parent=11 // pred_fallthru
          _
        // Predicated region
        $region21: #{tpu_custom_call.1} parent=11 // pred_check
          %p184 = pneg %p107
        $region22: #{tpu_custom_call.1} parent=11 // pred_check_branch
          %186 = sbr.rel (%p184) target = $region24
        $region23: #{tpu_custom_call.1} parent=11 // pred_region
          %188 = vsyncadd [#allocation6], 0
          %s189 = sshll.u32 %s3, 4
          %s190 = int_to_ptr.hbm [resolvable:$true] %s189
          %s191 = sshll.u32 [#allocation7], 4
          %s192 = int_to_ptr.vmem [resolvable:$true] %s191
          %197 = dma.hbm_to_vmem [thread:$0]  %s190, 1024, %s192, [#allocation6], 64, 64, 4
        $region24: #{tpu_custom_call.1} parent=11 // pred_fallthru
          _
        // Predicated region
        $region25: #{tpu_custom_call.1} parent=11 // pred_check
          %p198 = pneg %p128
        $region26: #{tpu_custom_call.1} parent=11 // pred_check_branch
          %200 = sbr.rel (%p198) target = $region28
        $region27: #{tpu_custom_call.1} parent=11 // pred_region
          _
        $region28: #{tpu_custom_call.1} parent=11 // pred_fallthru
          _
      $region12: #{tpu_custom_call.1} parent=5 // pred_fallthru
        _
      %p201 = scmp.lt.s32.totalorder %s18, 2
      // Predicated region
      $region29: #{tpu_custom_call.1} parent=5 // pred_check
        %p202 = pneg %p201
      $region30: #{tpu_custom_call.1} parent=5 // pred_check_branch
        %204 = sbr.rel (%p202) target = $region32
      $region31: #{tpu_custom_call.1} parent=5 // pred_region
        // Predicated region
        $region33: #{tpu_custom_call.1} parent=31 // pred_check
          %p205 = pneg %p38
        $region34: #{tpu_custom_call.1} parent=31 // pred_check_branch
          %207 = sbr.rel (%p205) target = $region36
        $region35: #{tpu_custom_call.1} parent=31 // pred_region
          %s208 = sand.u32 %s28, 1
          %s209 = scalar_lea.sflag [#allocation3], %s208
          %s210 = sand.u32 %s28, 1
          %s211 = smul.addr %s210, 128
          %s212 = scalar_lea.vmem [#allocation2], %s211
          %s213 = smul.u32 16, %s18
          %215 = vsyncadd %s209, 0
          %s216 = smul.addr %s213, 8
          %s217 = scalar_lea.hbm %s0, %s216
          %s218 = sshll.u32 %s217, 4
          %s219 = int_to_ptr.hbm [resolvable:$true] %s218
          %s220 = sshll.u32 %s212, 4
          %s221 = int_to_ptr.vmem [resolvable:$true] %s220
          %226 = dma.hbm_to_vmem [thread:$0]  %s219, 2048, %s221, %s209, 128, 128, 8
        $region36: #{tpu_custom_call.1} parent=31 // pred_fallthru
          _
      $region32: #{tpu_custom_call.1} parent=5 // pred_fallthru
        _
      %p227 = scmp.le.s32.totalorder 1, %s18
      %p228 = scmp.lt.s32.totalorder %s18, 3
      %p229 = pnand %p227, %p228
      %p230 = pneg %p229
      // Predicated region
      $region37: #{tpu_custom_call.1} parent=5 // pred_check
        _
      $region38: #{tpu_custom_call.1} parent=5 // pred_check_branch
        %232 = sbr.rel (%p229) target = $region40
      $region39: #{tpu_custom_call.1} parent=5 // pred_region
        %s233 = ssub.s32 %s18, 1
        %s234 = sand.u32 %s31, 1
        %s235 = scalar_lea.sflag [#allocation3], %s234
        %s236 = sand.u32 %s31, 1
        %s237 = smul.addr %s236, 128
        %s238 = scalar_lea.vmem [#allocation2], %s237
        // Predicated region
        $region41: #{tpu_custom_call.1} parent=39 // pred_check
          %p239 = pneg %p44
        $region42: #{tpu_custom_call.1} parent=39 // pred_check_branch
          %241 = sbr.rel (%p239) target = $region44
        $region43: #{tpu_custom_call.1} parent=39 // pred_region
          %243 = dma.done %s235, 2048
        $region44: #{tpu_custom_call.1} parent=39 // pred_fallthru
          _
        // Predicated region
        $region45: #{tpu_custom_call.1} parent=39 // pred_check
          %p244 = pneg %p65
        $region46: #{tpu_custom_call.1} parent=39 // pred_check_branch
          %246 = sbr.rel (%p244) target = $region48
        $region47: #{tpu_custom_call.1} parent=39 // pred_region
          %248 = dma.done [#allocation6], 16
        $region48: #{tpu_custom_call.1} parent=39 // pred_fallthru
          _
        // Predicated region
        $region49: #{tpu_custom_call.1} parent=39 // pred_check
          %p249 = pneg %p107
        $region50: #{tpu_custom_call.1} parent=39 // pred_check_branch
          %251 = sbr.rel (%p249) target = $region52
        $region51: #{tpu_custom_call.1} parent=39 // pred_region
          %253 = dma.done [#allocation6], 1024
        $region52: #{tpu_custom_call.1} parent=39 // pred_fallthru
          _
        %s254 = sand.u32 %s31, 1
        %s255 = scalar_lea.sflag [#allocation3], %s254
        %s256 = sand.u32 %s31, 1
        %s257 = smul.addr %s256, 128
        %s258 = scalar_lea.vmem [#allocation2], %s257
        %p259 = pneg %p44
        %p260 = pneg %p41
        %p261 = pneg %p65
        %p262 = pneg %p62
        %p263 = pneg %p86
        %p264 = pneg %p83
        %p265 = pneg %p107
        %p266 = pneg %p104
        %p267 = pneg %p128
        %p268 = pneg %p125
        %p269 = pneg %p154
        %p270 = pneg %p151
        %s271 = sand.u32 %s141, 1
        %s272 = scalar_lea.sflag [#allocation4], %s271
        %s273 = sand.u32 %s141, 1
        %s274 = smul.addr %s273, 128
        %s275 = scalar_lea.vmem [#allocation8], %s274
        %s276 = smul.u32 16, %s23
        %s277 = smul.u32 16, %s23
        %v278 = vld [vmem:[%s238] sm:$0xff]
        %v279 = vld [vmem:[%s238 + $0x8] sm:$0xff]
        %v280 = vld [vmem:[%s238 + $0x10] sm:$0xff]
        %v281 = vld [vmem:[%s238 + $0x18] sm:$0xff]
        %v282 = vld [vmem:[%s238 + $0x20] sm:$0xff]
        %v283 = vld [vmem:[%s238 + $0x28] sm:$0xff]
        %v284 = vld [vmem:[%s238 + $0x30] sm:$0xff]
        %v285 = vld [vmem:[%s238 + $0x38] sm:$0xff]
        %v286 = vld [vmem:[%s238 + $0x40] sm:$0xff]
        %v287 = vld [vmem:[%s238 + $0x48] sm:$0xff]
        %v288 = vld [vmem:[%s238 + $0x50] sm:$0xff]
        %v289 = vld [vmem:[%s238 + $0x58] sm:$0xff]
        %v290 = vld [vmem:[%s238 + $0x60] sm:$0xff]
        %v291 = vld [vmem:[%s238 + $0x68] sm:$0xff]
        %v292 = vld [vmem:[%s238 + $0x70] sm:$0xff]
        %v293 = vld [vmem:[%s238 + $0x78] sm:$0xff]
        %294 = vadd.xlane.f32.xlu0 %v278
        %v295 = vpop.xlane.xlu0 %294
        %296 = vadd.xlane.f32.xlu0 %v279
        %v297 = vpop.xlane.xlu0 %296
        %298 = vadd.xlane.f32.xlu0 %v280
        %v299 = vpop.xlane.xlu0 %298
        %300 = vadd.xlane.f32.xlu0 %v281
        %v301 = vpop.xlane.xlu0 %300
        %302 = vadd.xlane.f32.xlu0 %v282
        %v303 = vpop.xlane.xlu0 %302
        %304 = vadd.xlane.f32.xlu0 %v283
        %v305 = vpop.xlane.xlu0 %304
        %306 = vadd.xlane.f32.xlu0 %v284
        %v307 = vpop.xlane.xlu0 %306
        %308 = vadd.xlane.f32.xlu0 %v285
        %v309 = vpop.xlane.xlu0 %308
        %310 = vadd.xlane.f32.xlu0 %v286
        %v311 = vpop.xlane.xlu0 %310
        %312 = vadd.xlane.f32.xlu0 %v287
        %v313 = vpop.xlane.xlu0 %312
        %314 = vadd.xlane.f32.xlu0 %v288
        %v315 = vpop.xlane.xlu0 %314
        %316 = vadd.xlane.f32.xlu0 %v289
        %v317 = vpop.xlane.xlu0 %316
        %318 = vadd.xlane.f32.xlu0 %v290
        %v319 = vpop.xlane.xlu0 %318
        %320 = vadd.xlane.f32.xlu0 %v291
        %v321 = vpop.xlane.xlu0 %320
        %322 = vadd.xlane.f32.xlu0 %v292
        %v323 = vpop.xlane.xlu0 %322
        %324 = vadd.xlane.f32.xlu0 %v293
        %v325 = vpop.xlane.xlu0 %324
        %v326 = vmul.f32 %v295, 0.0625
        %v327 = vmul.f32 %v297, 0.0625
        %v328 = vmul.f32 %v299, 0.0625
        %v329 = vmul.f32 %v301, 0.0625
        %v330 = vmul.f32 %v303, 0.0625
        %v331 = vmul.f32 %v305, 0.0625
        %v332 = vmul.f32 %v307, 0.0625
        %v333 = vmul.f32 %v309, 0.0625
        %v334 = vmul.f32 %v311, 0.0625
        %v335 = vmul.f32 %v313, 0.0625
        %v336 = vmul.f32 %v315, 0.0625
        %v337 = vmul.f32 %v317, 0.0625
        %v338 = vmul.f32 %v319, 0.0625
        %v339 = vmul.f32 %v321, 0.0625
        %v340 = vmul.f32 %v323, 0.0625
        %v341 = vmul.f32 %v325, 0.0625
        %v342 = vmul.f32 %v278, %v278
        %v343 = vmul.f32 %v279, %v279
        %v344 = vmul.f32 %v280, %v280
        %v345 = vmul.f32 %v281, %v281
        %v346 = vmul.f32 %v282, %v282
        %v347 = vmul.f32 %v283, %v283
        %v348 = vmul.f32 %v284, %v284
        %v349 = vmul.f32 %v285, %v285
        %v350 = vmul.f32 %v286, %v286
        %v351 = vmul.f32 %v287, %v287
        %v352 = vmul.f32 %v288, %v288
        %v353 = vmul.f32 %v289, %v289
        %v354 = vmul.f32 %v290, %v290
        %v355 = vmul.f32 %v291, %v291
        %v356 = vmul.f32 %v292, %v292
        %v357 = vmul.f32 %v293, %v293
        %358 = vadd.xlane.f32.xlu0 %v342
        %v359 = vpop.xlane.xlu0 %358
        %360 = vadd.xlane.f32.xlu0 %v343
        %v361 = vpop.xlane.xlu0 %360
        %362 = vadd.xlane.f32.xlu0 %v344
        %v363 = vpop.xlane.xlu0 %362
        %364 = vadd.xlane.f32.xlu0 %v345
        %v365 = vpop.xlane.xlu0 %364
        %366 = vadd.xlane.f32.xlu0 %v346
        %v367 = vpop.xlane.xlu0 %366
        %368 = vadd.xlane.f32.xlu0 %v347
        %v369 = vpop.xlane.xlu0 %368
        %370 = vadd.xlane.f32.xlu0 %v348
        %v371 = vpop.xlane.xlu0 %370
        %372 = vadd.xlane.f32.xlu0 %v349
        %v373 = vpop.xlane.xlu0 %372
        %374 = vadd.xlane.f32.xlu0 %v350
        %v375 = vpop.xlane.xlu0 %374
        %376 = vadd.xlane.f32.xlu0 %v351
        %v377 = vpop.xlane.xlu0 %376
        %378 = vadd.xlane.f32.xlu0 %v352
        %v379 = vpop.xlane.xlu0 %378
        %380 = vadd.xlane.f32.xlu0 %v353
        %v381 = vpop.xlane.xlu0 %380
        %382 = vadd.xlane.f32.xlu0 %v354
        %v383 = vpop.xlane.xlu0 %382
        %384 = vadd.xlane.f32.xlu0 %v355
        %v385 = vpop.xlane.xlu0 %384
        %386 = vadd.xlane.f32.xlu0 %v356
        %v387 = vpop.xlane.xlu0 %386
        %388 = vadd.xlane.f32.xlu0 %v357
        %v389 = vpop.xlane.xlu0 %388
        %v390 = vmul.f32 %v359, 0.0625
        %v391 = vmul.f32 %v361, 0.0625
        %v392 = vmul.f32 %v363, 0.0625
        %v393 = vmul.f32 %v365, 0.0625
        %v394 = vmul.f32 %v367, 0.0625
        %v395 = vmul.f32 %v369, 0.0625
        %v396 = vmul.f32 %v371, 0.0625
        %v397 = vmul.f32 %v373, 0.0625
        %v398 = vmul.f32 %v375, 0.0625
        %v399 = vmul.f32 %v377, 0.0625
        %v400 = vmul.f32 %v379, 0.0625
        %v401 = vmul.f32 %v381, 0.0625
        %v402 = vmul.f32 %v383, 0.0625
        %v403 = vmul.f32 %v385, 0.0625
        %v404 = vmul.f32 %v387, 0.0625
        %v405 = vmul.f32 %v389, 0.0625
        %v406 = vmul.f32 %v326, %v326
        %v407 = vmul.f32 %v327, %v327
        %v408 = vmul.f32 %v328, %v328
        %v409 = vmul.f32 %v329, %v329
        %v410 = vmul.f32 %v330, %v330
        %v411 = vmul.f32 %v331, %v331
        %v412 = vmul.f32 %v332, %v332
        %v413 = vmul.f32 %v333, %v333
        %v414 = vmul.f32 %v334, %v334
        %v415 = vmul.f32 %v335, %v335
        %v416 = vmul.f32 %v336, %v336
        %v417 = vmul.f32 %v337, %v337
        %v418 = vmul.f32 %v338, %v338
        %v419 = vmul.f32 %v339, %v339
        %v420 = vmul.f32 %v340, %v340
        %v421 = vmul.f32 %v341, %v341
        %v422 = vsub.f32 %v390, %v406
        %v423 = vsub.f32 %v391, %v407
        %v424 = vsub.f32 %v392, %v408
        %v425 = vsub.f32 %v393, %v409
        %v426 = vsub.f32 %v394, %v410
        %v427 = vsub.f32 %v395, %v411
        %v428 = vsub.f32 %v396, %v412
        %v429 = vsub.f32 %v397, %v413
        %v430 = vsub.f32 %v398, %v414
        %v431 = vsub.f32 %v399, %v415
        %v432 = vsub.f32 %v400, %v416
        %v433 = vsub.f32 %v401, %v417
        %v434 = vsub.f32 %v402, %v418
        %v435 = vsub.f32 %v403, %v419
        %v436 = vsub.f32 %v404, %v420
        %v437 = vsub.f32 %v405, %v421
        %v438 = vmax.f32 %v422, 0.0
        %v439 = vmax.f32 %v423, 0.0
        %v440 = vmax.f32 %v424, 0.0
        %v441 = vmax.f32 %v425, 0.0
        %v442 = vmax.f32 %v426, 0.0
        %v443 = vmax.f32 %v427, 0.0
        %v444 = vmax.f32 %v428, 0.0
        %v445 = vmax.f32 %v429, 0.0
        %v446 = vmax.f32 %v430, 0.0
        %v447 = vmax.f32 %v431, 0.0
        %v448 = vmax.f32 %v432, 0.0
        %v449 = vmax.f32 %v433, 0.0
        %v450 = vmax.f32 %v434, 0.0
        %v451 = vmax.f32 %v435, 0.0
        %v452 = vmax.f32 %v436, 0.0
        %v453 = vmax.f32 %v437, 0.0
        %v454 = vsub.f32 %v278, %v326
        %v455 = vsub.f32 %v279, %v327
        %v456 = vsub.f32 %v280, %v328
        %v457 = vsub.f32 %v281, %v329
        %v458 = vsub.f32 %v282, %v330
        %v459 = vsub.f32 %v283, %v331
        %v460 = vsub.f32 %v284, %v332
        %v461 = vsub.f32 %v285, %v333
        %v462 = vsub.f32 %v286, %v334
        %v463 = vsub.f32 %v287, %v335
        %v464 = vsub.f32 %v288, %v336
        %v465 = vsub.f32 %v289, %v337
        %v466 = vsub.f32 %v290, %v338
        %v467 = vsub.f32 %v291, %v339
        %v468 = vsub.f32 %v292, %v340
        %v469 = vsub.f32 %v293, %v341
        %v470 = vadd.f32 %v438, 1e-05
        %v471 = vadd.f32 %v439, 1e-05
        %v472 = vadd.f32 %v440, 1e-05
        %v473 = vadd.f32 %v441, 1e-05
        %v474 = vadd.f32 %v442, 1e-05
        %v475 = vadd.f32 %v443, 1e-05
        %v476 = vadd.f32 %v444, 1e-05
        %v477 = vadd.f32 %v445, 1e-05
        %v478 = vadd.f32 %v446, 1e-05
        %v479 = vadd.f32 %v447, 1e-05
        %v480 = vadd.f32 %v448, 1e-05
        %v481 = vadd.f32 %v449, 1e-05
        %v482 = vadd.f32 %v450, 1e-05
        %v483 = vadd.f32 %v451, 1e-05
        %v484 = vadd.f32 %v452, 1e-05
        %v485 = vadd.f32 %v453, 1e-05
        %v486 = vrsqrt.pop %v470
        %v487 = vmul.f32 %v486, %v470
        %v488 = vmul.f32 %v487, %v486
        %v489 = vmul.f32 0.5, %v488
        %v490 = vsub.f32 1.5, %v489
        %v491 = vmul.f32 %v486, %v490
        %vm492 = vweird.f32 %v470
        %vm493 = vweird.f32 %v486
        %vm494 = vmor %vm492, %vm493
        %v495 = vsel %vm494, %v486, %v491
        %v496 = vrsqrt.pop %v471
        %v497 = vmul.f32 %v496, %v471
        %v498 = vmul.f32 %v497, %v496
        %v499 = vmul.f32 0.5, %v498
        %v500 = vsub.f32 1.5, %v499
        %v501 = vmul.f32 %v496, %v500
        %vm502 = vweird.f32 %v471
        %vm503 = vweird.f32 %v496
        %vm504 = vmor %vm502, %vm503
        %v505 = vsel %vm504, %v496, %v501
        %v506 = vrsqrt.pop %v472
        %v507 = vmul.f32 %v506, %v472
        %v508 = vmul.f32 %v507, %v506
        %v509 = vmul.f32 0.5, %v508
        %v510 = vsub.f32 1.5, %v509
        %v511 = vmul.f32 %v506, %v510
        %vm512 = vweird.f32 %v472
        %vm513 = vweird.f32 %v506
        %vm514 = vmor %vm512, %vm513
        %v515 = vsel %vm514, %v506, %v511
        %v516 = vrsqrt.pop %v473
        %v517 = vmul.f32 %v516, %v473
        %v518 = vmul.f32 %v517, %v516
        %v519 = vmul.f32 0.5, %v518
        %v520 = vsub.f32 1.5, %v519
        %v521 = vmul.f32 %v516, %v520
        %vm522 = vweird.f32 %v473
        %vm523 = vweird.f32 %v516
        %vm524 = vmor %vm522, %vm523
        %v525 = vsel %vm524, %v516, %v521
        %v526 = vrsqrt.pop %v474
        %v527 = vmul.f32 %v526, %v474
        %v528 = vmul.f32 %v527, %v526
        %v529 = vmul.f32 0.5, %v528
        %v530 = vsub.f32 1.5, %v529
        %v531 = vmul.f32 %v526, %v530
        %vm532 = vweird.f32 %v474
        %vm533 = vweird.f32 %v526
        %vm534 = vmor %vm532, %vm533
        %v535 = vsel %vm534, %v526, %v531
        %v536 = vrsqrt.pop %v475
        %v537 = vmul.f32 %v536, %v475
        %v538 = vmul.f32 %v537, %v536
        %v539 = vmul.f32 0.5, %v538
        %v540 = vsub.f32 1.5, %v539
        %v541 = vmul.f32 %v536, %v540
        %vm542 = vweird.f32 %v475
        %vm543 = vweird.f32 %v536
        %vm544 = vmor %vm542, %vm543
        %v545 = vsel %vm544, %v536, %v541
        %v546 = vrsqrt.pop %v476
        %v547 = vmul.f32 %v546, %v476
        %v548 = vmul.f32 %v547, %v546
        %v549 = vmul.f32 0.5, %v548
        %v550 = vsub.f32 1.5, %v549
        %v551 = vmul.f32 %v546, %v550
        %vm552 = vweird.f32 %v476
        %vm553 = vweird.f32 %v546
        %vm554 = vmor %vm552, %vm553
        %v555 = vsel %vm554, %v546, %v551
        %v556 = vrsqrt.pop %v477
        %v557 = vmul.f32 %v556, %v477
        %v558 = vmul.f32 %v557, %v556
        %v559 = vmul.f32 0.5, %v558
        %v560 = vsub.f32 1.5, %v559
        %v561 = vmul.f32 %v556, %v560
        %vm562 = vweird.f32 %v477
        %vm563 = vweird.f32 %v556
        %vm564 = vmor %vm562, %vm563
        %v565 = vsel %vm564, %v556, %v561
        %v566 = vrsqrt.pop %v478
        %v567 = vmul.f32 %v566, %v478
        %v568 = vmul.f32 %v567, %v566
        %v569 = vmul.f32 0.5, %v568
        %v570 = vsub.f32 1.5, %v569
        %v571 = vmul.f32 %v566, %v570
        %vm572 = vweird.f32 %v478
        %vm573 = vweird.f32 %v566
        %vm574 = vmor %vm572, %vm573
        %v575 = vsel %vm574, %v566, %v571
        %v576 = vrsqrt.pop %v479
        %v577 = vmul.f32 %v576, %v479
        %v578 = vmul.f32 %v577, %v576
        %v579 = vmul.f32 0.5, %v578
        %v580 = vsub.f32 1.5, %v579
        %v581 = vmul.f32 %v576, %v580
        %vm582 = vweird.f32 %v479
        %vm583 = vweird.f32 %v576
        %vm584 = vmor %vm582, %vm583
        %v585 = vsel %vm584, %v576, %v581
        %v586 = vrsqrt.pop %v480
        %v587 = vmul.f32 %v586, %v480
        %v588 = vmul.f32 %v587, %v586
        %v589 = vmul.f32 0.5, %v588
        %v590 = vsub.f32 1.5, %v589
        %v591 = vmul.f32 %v586, %v590
        %vm592 = vweird.f32 %v480
        %vm593 = vweird.f32 %v586
        %vm594 = vmor %vm592, %vm593
        %v595 = vsel %vm594, %v586, %v591
        %v596 = vrsqrt.pop %v481
        %v597 = vmul.f32 %v596, %v481
        %v598 = vmul.f32 %v597, %v596
        %v599 = vmul.f32 0.5, %v598
        %v600 = vsub.f32 1.5, %v599
        %v601 = vmul.f32 %v596, %v600
        %vm602 = vweird.f32 %v481
        %vm603 = vweird.f32 %v596
        %vm604 = vmor %vm602, %vm603
        %v605 = vsel %vm604, %v596, %v601
        %v606 = vrsqrt.pop %v482
        %v607 = vmul.f32 %v606, %v482
        %v608 = vmul.f32 %v607, %v606
        %v609 = vmul.f32 0.5, %v608
        %v610 = vsub.f32 1.5, %v609
        %v611 = vmul.f32 %v606, %v610
        %vm612 = vweird.f32 %v482
        %vm613 = vweird.f32 %v606
        %vm614 = vmor %vm612, %vm613
        %v615 = vsel %vm614, %v606, %v611
        %v616 = vrsqrt.pop %v483
        %v617 = vmul.f32 %v616, %v483
        %v618 = vmul.f32 %v617, %v616
        %v619 = vmul.f32 0.5, %v618
        %v620 = vsub.f32 1.5, %v619
        %v621 = vmul.f32 %v616, %v620
        %vm622 = vweird.f32 %v483
        %vm623 = vweird.f32 %v616
        %vm624 = vmor %vm622, %vm623
        %v625 = vsel %vm624, %v616, %v621
        %v626 = vrsqrt.pop %v484
        %v627 = vmul.f32 %v626, %v484
        %v628 = vmul.f32 %v627, %v626
        %v629 = vmul.f32 0.5, %v628
        %v630 = vsub.f32 1.5, %v629
        %v631 = vmul.f32 %v626, %v630
        %vm632 = vweird.f32 %v484
        %vm633 = vweird.f32 %v626
        %vm634 = vmor %vm632, %vm633
        %v635 = vsel %vm634, %v626, %v631
        %v636 = vrsqrt.pop %v485
        %v637 = vmul.f32 %v636, %v485
        %v638 = vmul.f32 %v637, %v636
        %v639 = vmul.f32 0.5, %v638
        %v640 = vsub.f32 1.5, %v639
        %v641 = vmul.f32 %v636, %v640
        %vm642 = vweird.f32 %v485
        %vm643 = vweird.f32 %v636
        %vm644 = vmor %vm642, %vm643
        %v645 = vsel %vm644, %v636, %v641
        %v646 = vmul.f32 %v454, %v495
        %v647 = vmul.f32 %v455, %v505
        %v648 = vmul.f32 %v456, %v515
        %v649 = vmul.f32 %v457, %v525
        %v650 = vmul.f32 %v458, %v535
        %v651 = vmul.f32 %v459, %v545
        %v652 = vmul.f32 %v460, %v555
        %v653 = vmul.f32 %v461, %v565
        %v654 = vmul.f32 %v462, %v575
        %v655 = vmul.f32 %v463, %v585
        %v656 = vmul.f32 %v464, %v595
        %v657 = vmul.f32 %v465, %v605
        %v658 = vmul.f32 %v466, %v615
        %v659 = vmul.f32 %v467, %v625
        %v660 = vmul.f32 %v468, %v635
        %v661 = vmul.f32 %v469, %v645
        %v662 = vld [vmem:[#allocation5] sm:$0x1]
        %v664 = vperm.slane %v662, 0
        %v666 = vmul.f32 %v646, %v664
        %v667 = vmul.f32 %v647, %v664
        %v668 = vmul.f32 %v648, %v664
        %v669 = vmul.f32 %v649, %v664
        %v670 = vmul.f32 %v650, %v664
        %v671 = vmul.f32 %v651, %v664
        %v672 = vmul.f32 %v652, %v664
        %v673 = vmul.f32 %v653, %v664
        %v674 = vmul.f32 %v654, %v664
        %v675 = vmul.f32 %v655, %v664
        %v676 = vmul.f32 %v656, %v664
        %v677 = vmul.f32 %v657, %v664
        %v678 = vmul.f32 %v658, %v664
        %v679 = vmul.f32 %v659, %v664
        %v680 = vmul.f32 %v660, %v664
        %v681 = vmul.f32 %v661, %v664
        %v682 = vld [vmem:[%s2] sm:$0x1]
        %v684 = vperm.slane %v682, 0
        %v686 = vadd.f32 %v666, %v684
        %v687 = vadd.f32 %v667, %v684
        %v688 = vadd.f32 %v668, %v684
        %v689 = vadd.f32 %v669, %v684
        %v690 = vadd.f32 %v670, %v684
        %v691 = vadd.f32 %v671, %v684
        %v692 = vadd.f32 %v672, %v684
        %v693 = vadd.f32 %v673, %v684
        %v694 = vadd.f32 %v674, %v684
        %v695 = vadd.f32 %v675, %v684
        %v696 = vadd.f32 %v676, %v684
        %v697 = vadd.f32 %v677, %v684
        %v698 = vadd.f32 %v678, %v684
        %v699 = vadd.f32 %v679, %v684
        %v700 = vadd.f32 %v680, %v684
        %v701 = vadd.f32 %v681, %v684
        %v702 = vpack.c.bf16 %v687, %v686
        %v703 = vpack.c.bf16 %v689, %v688
        %v704 = vpack.c.bf16 %v691, %v690
        %v705 = vpack.c.bf16 %v693, %v692
        %v706 = vpack.c.bf16 %v695, %v694
        %v707 = vpack.c.bf16 %v697, %v696
        %v708 = vpack.c.bf16 %v699, %v698
        %v709 = vpack.c.bf16 %v701, %v700
        %v710 = vld [vmem:[#allocation7] sm:$0xf]
        %v711 = vld [vmem:[#allocation7 + $0x4] sm:$0xf]
        %v712 = vld [vmem:[#allocation7 + $0x8] sm:$0xf]
        %v713 = vld [vmem:[#allocation7 + $0xc] sm:$0xf]
        %v714 = vld [vmem:[#allocation7 + $0x10] sm:$0xf]
        %v715 = vld [vmem:[#allocation7 + $0x14] sm:$0xf]
        %v716 = vld [vmem:[#allocation7 + $0x18] sm:$0xf]
        %v717 = vld [vmem:[#allocation7 + $0x1c] sm:$0xf]
        %v718 = vld [vmem:[#allocation7 + $0x20] sm:$0xf]
        %v719 = vld [vmem:[#allocation7 + $0x24] sm:$0xf]
        %v720 = vld [vmem:[#allocation7 + $0x28] sm:$0xf]
        %v721 = vld [vmem:[#allocation7 + $0x2c] sm:$0xf]
        %v722 = vld [vmem:[#allocation7 + $0x30] sm:$0xf]
        %v723 = vld [vmem:[#allocation7 + $0x34] sm:$0xf]
        %v724 = vld [vmem:[#allocation7 + $0x38] sm:$0xf]
        %v725 = vld [vmem:[#allocation7 + $0x3c] sm:$0xf]
        %v726 = vld [vmem:[%s4] sm:$0x1]
        %v728 = vperm.slane %v726, 0
        %v746 = vunpack.c.l.b16 %v710
        %v747 = vunpack.c.l.b16 %v711
        %v748 = vunpack.c.l.b16 %v712
        %v749 = vunpack.c.l.b16 %v713
        %v750 = vunpack.c.l.b16 %v714
        %v751 = vunpack.c.l.b16 %v715
        %v752 = vunpack.c.l.b16 %v716
        %v753 = vunpack.c.l.b16 %v717
        %v754 = vunpack.c.l.b16 %v718
        %v755 = vunpack.c.l.b16 %v719
        %v756 = vunpack.c.l.b16 %v720
        %v757 = vunpack.c.l.b16 %v721
        %v758 = vunpack.c.l.b16 %v722
        %v759 = vunpack.c.l.b16 %v723
        %v760 = vunpack.c.l.b16 %v724
        %v761 = vunpack.c.l.b16 %v725
        %v762 = vpack.c.b16 %v747, %v746
        %v763 = vpack.c.b16 %v749, %v748
        %v764 = vpack.c.b16 %v751, %v750
        %v765 = vpack.c.b16 %v753, %v752
        %v766 = vpack.c.b16 %v755, %v754
        %v767 = vpack.c.b16 %v757, %v756
        %v768 = vpack.c.b16 %v759, %v758
        %v769 = vpack.c.b16 %v761, %v760
        %778 = vmatpush.bf16.msra.mxu0 %v769
        %779 = vmatpush.bf16.msra.mxu0 %v768
        %780 = vmatpush.bf16.msra.mxu0 %v767
        %781 = vmatpush.bf16.msra.mxu0 %v766
        %782 = vmatpush.bf16.msra.mxu0 %v765
        %783 = vmatpush.bf16.msra.mxu0 %v764
        %784 = vmatpush.bf16.msra.mxu0 %v763
        %785 = vmatpush.bf16.msra.mxu0 %v762
        %786 = vmatmul.bf16.gmra.mxu0 %v702
        %v787 = vpop.f32.mrf.mxu0
        %v788 = vadd.f32 %v728, %v787
        %v789 = vpop.f32.mrf.mxu0
        %v790 = vadd.f32 %v728, %v789
        %791 = vmatmul.bf16.gmra.mxu0 %v703
        %v792 = vpop.f32.mrf.mxu0
        %v793 = vadd.f32 %v728, %v792
        %v794 = vpop.f32.mrf.mxu0
        %v795 = vadd.f32 %v728, %v794
        %796 = vmatmul.bf16.gmra.mxu0 %v704
        %v797 = vpop.f32.mrf.mxu0
        %v798 = vadd.f32 %v728, %v797
        %v799 = vpop.f32.mrf.mxu0
        %v800 = vadd.f32 %v728, %v799
        %801 = vmatmul.bf16.gmra.mxu0 %v705
        %v802 = vpop.f32.mrf.mxu0
        %v803 = vadd.f32 %v728, %v802
        %v804 = vpop.f32.mrf.mxu0
        %v805 = vadd.f32 %v728, %v804
        %806 = vmatmul.bf16.gmra.mxu0 %v706
        %v807 = vpop.f32.mrf.mxu0
        %v808 = vadd.f32 %v728, %v807
        %v809 = vpop.f32.mrf.mxu0
        %v810 = vadd.f32 %v728, %v809
        %811 = vmatmul.bf16.gmra.mxu0 %v707
        %v812 = vpop.f32.mrf.mxu0
        %v813 = vadd.f32 %v728, %v812
        %v814 = vpop.f32.mrf.mxu0
        %v815 = vadd.f32 %v728, %v814
        %816 = vmatmul.bf16.gmra.mxu0 %v708
        %v817 = vpop.f32.mrf.mxu0
        %v818 = vadd.f32 %v728, %v817
        %v819 = vpop.f32.mrf.mxu0
        %v820 = vadd.f32 %v728, %v819
        %821 = vmatmul.bf16.gmra.mxu0 %v709
        %v822 = vpop.f32.mrf.mxu0
        %v823 = vadd.f32 %v728, %v822
        %v824 = vpop.f32.mrf.mxu0
        %v825 = vadd.f32 %v728, %v824
        %826 = vdwg.mxu0
        %827 = vst [vmem:[%s275] sm:$0xff] %v788
        %828 = vst [vmem:[%s275 + $0x8] sm:$0xff] %v790
        %829 = vst [vmem:[%s275 + $0x10] sm:$0xff] %v793
        %830 = vst [vmem:[%s275 + $0x18] sm:$0xff] %v795
        %831 = vst [vmem:[%s275 + $0x20] sm:$0xff] %v798
        %832 = vst [vmem:[%s275 + $0x28] sm:$0xff] %v800
        %833 = vst [vmem:[%s275 + $0x30] sm:$0xff] %v803
        %834 = vst [vmem:[%s275 + $0x38] sm:$0xff] %v805
        %835 = vst [vmem:[%s275 + $0x40] sm:$0xff] %v808
        %836 = vst [vmem:[%s275 + $0x48] sm:$0xff] %v810
        %837 = vst [vmem:[%s275 + $0x50] sm:$0xff] %v813
        %838 = vst [vmem:[%s275 + $0x58] sm:$0xff] %v815
        %839 = vst [vmem:[%s275 + $0x60] sm:$0xff] %v818
        %840 = vst [vmem:[%s275 + $0x68] sm:$0xff] %v820
        %841 = vst [vmem:[%s275 + $0x70] sm:$0xff] %v823
        %842 = vst [vmem:[%s275 + $0x78] sm:$0xff] %v825
        %s843 = sand.u32 %s141, 1
        %s844 = scalar_lea.sflag [#allocation4], %s843
        %s845 = sand.u32 %s141, 1
        %s846 = smul.addr %s845, 128
        %s847 = scalar_lea.vmem [#allocation8], %s846
        // Predicated region
        $region53: #{tpu_custom_call.1} parent=39 // pred_check
          %p848 = pneg %p151
        $region54: #{tpu_custom_call.1} parent=39 // pred_check_branch
          %850 = sbr.rel (%p848) target = $region56
        $region55: #{tpu_custom_call.1} parent=39 // pred_region
          %s851 = smul.u32 16, %s23
          %853 = vsyncadd %s844, 0
          %s854 = smul.addr %s851, 8
          %s855 = scalar_lea.hbm %s5, %s854
          %s856 = sshll.u32 %s847, 4
          %s857 = int_to_ptr.vmem [resolvable:$true] %s856
          %s858 = sshll.u32 %s855, 4
          %s859 = int_to_ptr.hbm [resolvable:$true] %s858
          %864 = dma.vmem_to_hbm [thread:$0]  %s857, 2048, %s859, %s844, 128, 128, 8
        $region56: #{tpu_custom_call.1} parent=39 // pred_fallthru
          _
      $region40: #{tpu_custom_call.1} parent=5 // pred_fallthru
        _
      %p865 = scmp.le.s32.totalorder 2, %s18
      // Predicated region
      $region57: #{tpu_custom_call.1} parent=5 // pred_check
        %p866 = pneg %p865
      $region58: #{tpu_custom_call.1} parent=5 // pred_check_branch
        %868 = sbr.rel (%p866) target = $region60
      $region59: #{tpu_custom_call.1} parent=5 // pred_region
        %s869 = ssub.s32 %s18, 2
        // Predicated region
        $region61: #{tpu_custom_call.1} parent=59 // pred_check
          %p870 = pneg %p157
        $region62: #{tpu_custom_call.1} parent=59 // pred_check_branch
          %872 = sbr.rel (%p870) target = $region64
        $region63: #{tpu_custom_call.1} parent=59 // pred_region
          %s873 = sand.u32 %s142, 1
          %s874 = scalar_lea.sflag [#allocation4], %s873
          %s875 = sand.u32 %s142, 1
          %s876 = smul.addr %s875, 128
          %s877 = scalar_lea.vmem [#allocation8], %s876
          %879 = dma.done %s874, 2048
        $region64: #{tpu_custom_call.1} parent=59 // pred_fallthru
          _
      $region60: #{tpu_custom_call.1} parent=5 // pred_fallthru
        _
    $region6: #{tpu_custom_call.1} parent=1 // loop_footer
      %s22 = sadd.s32 1, %s18
    $region7: #{tpu_custom_call.1} parent=1 // loop_footer_branch
      %17 = sbr.rel target = $region3
    $region8: #{tpu_custom_call.1} parent=1 // loop_exit
      _
    %880 = vsyncpa [#allocation3], 1
    %s881 = scalar_lea.sflag [#allocation3], 1
    %882 = vsyncpa %s881, 1
    %883 = vsyncpa [#allocation6], 1
    %884 = vsyncpa [#allocation4], 1
    %s885 = scalar_lea.sflag [#allocation4], 1
    %886 = vsyncpa %s885, 1

</llo_original>
